<compile_context>
chip_gen: v7x
topology: tpu7x:2x2x1
jax: 0.10.0
libtpu: 0.0.40
codegen_flags: <defaults>
</compile_context>

<pallas_src>
import functools

import jax
import jax.numpy as jnp
from jax.experimental import pallas as pl
from jax.experimental.pallas import tpu as pltpu

_LANE = 128
_SUBLANE = 8
_FOLD = 8                                # parallel accumulator rows (breaks serial add chain)
_SMALL_INPUT_ELEMS = _SUBLANE * _LANE    # below this, a pallas_call's fixed cost dominates


def _round_up(x, m):
    return (x + m - 1) // m * m


def _phys_slab_bytes(h, w, dtype):
    """Bytes one (h, w) slab occupies in (8,128)-tiled VMEM/HBM."""
    return (_round_up(max(h, 1), _SUBLANE)
            * _round_up(max(w, 1), _LANE)
            * jnp.dtype(dtype).itemsize)


def _vmem_capacity_bytes():
    try:
        return int(pltpu.get_tpu_info().vmem_capacity_bytes)
    except Exception:
        return 64 << 20   # conservative (v7x per-core VMEM) if the query is unavailable


def _dice_reference(inputs, targets, smooth=1.0):
    x = inputs.reshape(-1).astype(jnp.float32)
    t = targets.reshape(-1).astype(jnp.float32)
    inter = jnp.sum(x * t)
    dice = (2.0 * inter + smooth) / (jnp.sum(x) + jnp.sum(t) + smooth)
    return 1.0 - dice


def _dice_kernel(x_ref, t_ref, inter_ref, sx_ref, st_ref, *, nb, rem, fold):
    """Accumulate vector partials of sum(x*t), sum(x), sum(t) across the grid."""
    k = pl.program_id(0)

    @pl.when(k == 0)
    def _init():
        inter_ref[...] = jnp.zeros_like(inter_ref)
        sx_ref[...] = jnp.zeros_like(sx_ref)
        st_ref[...] = jnp.zeros_like(st_ref)

    def _accum_full():
        # Full tile fast path: fold the streaming axis into `fold` parallel
        # accumulator rows with pure vreg-wise VPU adds (no cross-lane work,
        # no masking).
        x = x_ref[...].astype(jnp.float32)
        t = t_ref[...].astype(jnp.float32)
        bl, h, w = x.shape

        def f(v):
            return jnp.sum(v.reshape(bl // fold, fold, h, w), axis=0)

        inter_ref[...] += f(x * t)
        sx_ref[...] += f(x)
        st_ref[...] += f(t)

    if rem == 0:
        _accum_full()
    else:
        # Ragged last block: static slice to the `rem` valid slabs (no iota /
        # select masking); interior blocks keep the unmasked fast path.
        @pl.when(k < nb - 1)
        def _interior():
            _accum_full()

        @pl.when(k == nb - 1)
        def _tail():
            x = x_ref[0:rem].astype(jnp.float32)
            t = t_ref[0:rem].astype(jnp.float32)
            inter_ref[0:1] += jnp.sum(x * t, axis=0, keepdims=True)
            sx_ref[0:1] += jnp.sum(x, axis=0, keepdims=True)
            st_ref[0:1] += jnp.sum(t, axis=0, keepdims=True)


def dice_loss(inputs, targets, smooth=1.0, *, block_rows=None):
    """DiceLoss.forward: 1 - (2*sum(x*t) + s) / (sum(x) + sum(t) + s)."""
    n = int(inputs.size)
    if inputs.ndim < 2 or inputs.shape != targets.shape or n < _SMALL_INPUT_ELEMS:
        # Tiny / degenerate inputs: fixed pallas_call cost dwarfs the reduction.
        return _dice_reference(inputs, targets, smooth)

    # ---- Layout-preserving 3-D view (no HBM relayout) -----------------------
    # Collapse every dim above the (8,128)-tiled trailing two dims.
    h, w = int(inputs.shape[-2]), int(inputs.shape[-1])
    lead = n // (h * w)
    if lead == 1 and h % _SUBLANE == 0 and h > _SUBLANE:
        # Rank-2 input: split the sublane-tiled row dim into the streaming axis
        # (still layout-preserving because h is a multiple of 8).
        lead, h = h // _SUBLANE, _SUBLANE
    x3 = inputs.reshape(lead, h, w)
    t3 = targets.reshape(lead, h, w)

    # ---- Generation-aware block sizing --------------------------------------
    vmem_cap = _vmem_capacity_bytes()
    slab_x = _phys_slab_bytes(h, w, x3.dtype)
    slab_t = _phys_slab_bytes(h, w, t3.dtype)
    slab_f32 = _phys_slab_bytes(h, w, jnp.float32)
    # Conservative per-leading-row VMEM cost: double-buffered input slabs plus
    # worst-case f32 temporaries (x, t upcasts and x*t product).
    cost_per_row = 2 * (slab_x + slab_t) + 3 * slab_f32
    budget = vmem_cap - (24 << 20)
    if budget < cost_per_row:
        # TODO(synk): also tile the trailing (h, w) dims for pathologically large slabs.
        return _dice_reference(inputs, targets, smooth)

    block_l = min(budget // cost_per_row, _round_up(lead, _SUBLANE))
    if block_rows is not None:
        block_l = max(1, min(block_l, int(block_rows)))
    if block_l >= _SUBLANE:
        block_l = (block_l // _SUBLANE) * _SUBLANE   # keep fold reshape valid
        fold = _FOLD
    else:
        fold = 1

    nb = (lead + block_l - 1) // block_l
    rem = lead % block_l          # 0 => exact split, all blocks take the fast path

    out_slab = jax.ShapeDtypeStruct((fold, h, w), jnp.float32)
    out_bytes = 3 * fold * slab_f32
    vmem_limit = int(min(vmem_cap - (4 << 20),
                         max(32 << 20, block_l * cost_per_row + out_bytes + (16 << 20))))

    kernel = functools.partial(_dice_kernel, nb=nb, rem=rem, fold=fold)
    in_spec = pl.BlockSpec((block_l, h, w), lambda k: (k, 0, 0))
    # Accumulators: same output block for every grid step -> VMEM-resident
    # across the whole ("arbitrary") reduction axis, written back once.
    acc_spec = pl.BlockSpec((fold, h, w), lambda k: (0, 0, 0))

    inter, sx, st = pl.pallas_call(
        kernel,
        out_shape=(out_slab, out_slab, out_slab),
        grid_spec=pltpu.PrefetchScalarGridSpec(
            num_scalar_prefetch=0,
            grid=(nb,),
            in_specs=[in_spec, in_spec],
            out_specs=(acc_spec, acc_spec, acc_spec),
        ),
        compiler_params=pltpu.CompilerParams(
            # TODO(synk): on 2-TensorCore chips (v7x) add a leading CORE_PARALLEL
            # axis with one partial-accumulator block per core.
            dimension_semantics=("arbitrary",),
            vmem_limit_bytes=vmem_limit,
        ),
        cost_estimate=pl.CostEstimate(
            flops=3 * n,
            transcendentals=0,
            bytes_accessed=n * (x3.dtype.itemsize + t3.dtype.itemsize),
        ),
    )(x3, t3)

    # Tiny final reduction + dice formula (negligible work, plain JAX).
    i = jnp.sum(inter)
    s = jnp.sum(sx) + jnp.sum(st)
    dice = (2.0 * i + smooth) / (s + smooth)
    return 1.0 - dice


if __name__ == "__main__":
    key = jax.random.PRNGKey(0)
    ks = jax.random.split(key, 6)

    # (B, C, H, W) = (2, 4, 16, 16): aligned spatial dims, single-block path.
    x1 = jax.nn.sigmoid(jax.random.normal(ks[0], (2, 4, 16, 16), dtype=jnp.float32))
    t1 = (jax.random.uniform(ks[1], (2, 4, 16, 16)) > 0.5).astype(jnp.float32)
    out1 = jax.block_until_ready(dice_loss(x1, t1))
    ref1 = jax.block_until_ready(_dice_reference(x1, t1))
    assert jnp.allclose(out1, ref1, atol=1e-5, rtol=1e-5), (out1, ref1)

    # Ragged spatial dims (padded-slab handling + ragged leading tail).
    x2 = jax.nn.sigmoid(jax.random.normal(ks[2], (2, 3, 17, 19), dtype=jnp.float32))
    t2 = (jax.random.uniform(ks[3], (2, 3, 17, 19)) > 0.5).astype(jnp.float32)
    out2 = jax.block_until_ready(dice_loss(x2, t2))
    ref2 = jax.block_until_ready(_dice_reference(x2, t2))
    assert jnp.allclose(out2, ref2, atol=1e-5, rtol=1e-5), (out2, ref2)

    # bf16 inputs, forced multi-block grid + ragged tail (3 grid steps), custom smooth.
    x3 = jax.nn.sigmoid(jax.random.normal(ks[4], (16, 4, 16, 16), dtype=jnp.bfloat16))
    t3 = (jax.random.uniform(ks[5], (16, 4, 16, 16)) > 0.5).astype(jnp.bfloat16)
    out3 = jax.block_until_ready(dice_loss(x3, t3, smooth=0.5, block_rows=24))
    ref3 = jax.block_until_ready(_dice_reference(x3, t3, 0.5))
    assert jnp.allclose(out3, ref3, atol=1e-3, rtol=1e-3), (out3, ref3)

    print("KERNEL_OK")
</pallas_src>

<mosaic_0001>
module attributes {stable_mosaic.version = 11 : i64} {
  func.func @_dice_kernel(%arg0: i32, %arg1: memref<8x16x16xf32, #tpu.memory_space<vmem>>, %arg2: memref<8x16x16xf32, #tpu.memory_space<vmem>>, %arg3: memref<8x16x16xf32, #tpu.memory_space<vmem>>, %arg4: memref<8x16x16xf32, #tpu.memory_space<vmem>>, %arg5: memref<8x16x16xf32, #tpu.memory_space<vmem>>) attributes {dimension_semantics = [#tpu.dimension_semantics<arbitrary>], iteration_bounds = array<i64: 1>, scalar_prefetch = 0 : i64, scratch_operands = 0 : i64, tpu.core_type = #tpu.core_type<tc>, window_params = [{transform_indices = @transform_0, window_bounds = array<i64: 8, 16, 16>}, {transform_indices = @transform_1, window_bounds = array<i64: 8, 16, 16>}, {pipeline_mode = #tpu.pipeline_mode<synchronous>, transform_indices = @transform_2, window_bounds = array<i64: 8, 16, 16>}, {pipeline_mode = #tpu.pipeline_mode<synchronous>, transform_indices = @transform_3, window_bounds = array<i64: 8, 16, 16>}, {pipeline_mode = #tpu.pipeline_mode<synchronous>, transform_indices = @transform_4, window_bounds = array<i64: 8, 16, 16>}]} {
    %c0_i32 = arith.constant 0 : i32
    %0 = arith.cmpi eq, %arg0, %c0_i32 : i32
    %1 = arith.extui %0 : i1 to i32
    %c0_i32_0 = arith.constant 0 : i32
    %2 = arith.cmpi ne, %1, %c0_i32_0 : i32
    scf.if %2 {
      %cst_26 = arith.constant 0.000000e+00 : f32
      %21 = vector.broadcast %cst_26 : f32 to vector<8x16x16xf32>
      %c0_27 = arith.constant 0 : index
      %c0_28 = arith.constant 0 : index
      %c0_29 = arith.constant 0 : index
      %22 = vector.load %arg3[%c0_27, %c0_28, %c0_29] : memref<8x16x16xf32, #tpu.memory_space<vmem>>, vector<8x16x16xf32>
      tpu.vector_store %arg3[%c0_27, %c0_28, %c0_29], %21 {strides = array<i32>} : memref<8x16x16xf32, #tpu.memory_space<vmem>>, vector<8x16x16xf32>,
      %cst_30 = arith.constant 0.000000e+00 : f32
      %23 = vector.broadcast %cst_30 : f32 to vector<8x16x16xf32>
      %c0_31 = arith.constant 0 : index
      %c0_32 = arith.constant 0 : index
      %c0_33 = arith.constant 0 : index
      %24 = vector.load %arg4[%c0_31, %c0_32, %c0_33] : memref<8x16x16xf32, #tpu.memory_space<vmem>>, vector<8x16x16xf32>
      tpu.vector_store %arg4[%c0_31, %c0_32, %c0_33], %23 {strides = array<i32>} : memref<8x16x16xf32, #tpu.memory_space<vmem>>, vector<8x16x16xf32>,
      %cst_34 = arith.constant 0.000000e+00 : f32
      %25 = vector.broadcast %cst_34 : f32 to vector<8x16x16xf32>
      %c0_35 = arith.constant 0 : index
      %c0_36 = arith.constant 0 : index
      %c0_37 = arith.constant 0 : index
      %26 = vector.load %arg5[%c0_35, %c0_36, %c0_37] : memref<8x16x16xf32, #tpu.memory_space<vmem>>, vector<8x16x16xf32>
      tpu.vector_store %arg5[%c0_35, %c0_36, %c0_37], %25 {strides = array<i32>} : memref<8x16x16xf32, #tpu.memory_space<vmem>>, vector<8x16x16xf32>,
    } else {
    }
    %c0 = arith.constant 0 : index
    %c0_1 = arith.constant 0 : index
    %c0_2 = arith.constant 0 : index
    %3 = vector.load %arg1[%c0, %c0_1, %c0_2] : memref<8x16x16xf32, #tpu.memory_space<vmem>>, vector<8x16x16xf32>
    %c0_3 = arith.constant 0 : index
    %c0_4 = arith.constant 0 : index
    %c0_5 = arith.constant 0 : index
    %4 = vector.load %arg2[%c0_3, %c0_4, %c0_5] : memref<8x16x16xf32, #tpu.memory_space<vmem>>, vector<8x16x16xf32>
    %c0_6 = arith.constant 0 : index
    %c0_7 = arith.constant 0 : index
    %c0_8 = arith.constant 0 : index
    %5 = vector.load %arg3[%c0_6, %c0_7, %c0_8] : memref<8x16x16xf32, #tpu.memory_space<vmem>>, vector<8x16x16xf32>
    %6 = arith.mulf %3, %4 : vector<8x16x16xf32>
    %7 = vector.shape_cast %6 : vector<8x16x16xf32> to vector<1x8x16x16xf32>
    %cst = arith.constant dense<0.000000e+00> : vector<8x16x16xf32>
    %8 = vector.multi_reduction <add>, %7, %cst [0] : vector<1x8x16x16xf32> to vector<8x16x16xf32>
    %9 = arith.addf %5, %8 : vector<8x16x16xf32>
    %c0_9 = arith.constant 0 : index
    %c0_10 = arith.constant 0 : index
    %c0_11 = arith.constant 0 : index
    %10 = vector.load %arg3[%c0_9, %c0_10, %c0_11] : memref<8x16x16xf32, #tpu.memory_space<vmem>>, vector<8x16x16xf32>
    tpu.vector_store %arg3[%c0_9, %c0_10, %c0_11], %9 {strides = array<i32>} : memref<8x16x16xf32, #tpu.memory_space<vmem>>, vector<8x16x16xf32>,
    %c0_12 = arith.constant 0 : index
    %c0_13 = arith.constant 0 : index
    %c0_14 = arith.constant 0 : index
    %11 = vector.load %arg4[%c0_12, %c0_13, %c0_14] : memref<8x16x16xf32, #tpu.memory_space<vmem>>, vector<8x16x16xf32>
    %12 = vector.shape_cast %3 : vector<8x16x16xf32> to vector<1x8x16x16xf32>
    %cst_15 = arith.constant dense<0.000000e+00> : vector<8x16x16xf32>
    %13 = vector.multi_reduction <add>, %12, %cst_15 [0] : vector<1x8x16x16xf32> to vector<8x16x16xf32>
    %14 = arith.addf %11, %13 : vector<8x16x16xf32>
    %c0_16 = arith.constant 0 : index
    %c0_17 = arith.constant 0 : index
    %c0_18 = arith.constant 0 : index
    %15 = vector.load %arg4[%c0_16, %c0_17, %c0_18] : memref<8x16x16xf32, #tpu.memory_space<vmem>>, vector<8x16x16xf32>
    tpu.vector_store %arg4[%c0_16, %c0_17, %c0_18], %14 {strides = array<i32>} : memref<8x16x16xf32, #tpu.memory_space<vmem>>, vector<8x16x16xf32>,
    %c0_19 = arith.constant 0 : index
    %c0_20 = arith.constant 0 : index
    %c0_21 = arith.constant 0 : index
    %16 = vector.load %arg5[%c0_19, %c0_20, %c0_21] : memref<8x16x16xf32, #tpu.memory_space<vmem>>, vector<8x16x16xf32>
    %17 = vector.shape_cast %4 : vector<8x16x16xf32> to vector<1x8x16x16xf32>
    %cst_22 = arith.constant dense<0.000000e+00> : vector<8x16x16xf32>
    %18 = vector.multi_reduction <add>, %17, %cst_22 [0] : vector<1x8x16x16xf32> to vector<8x16x16xf32>
    %19 = arith.addf %16, %18 : vector<8x16x16xf32>
    %c0_23 = arith.constant 0 : index
    %c0_24 = arith.constant 0 : index
    %c0_25 = arith.constant 0 : index
    %20 = vector.load %arg5[%c0_23, %c0_24, %c0_25] : memref<8x16x16xf32, #tpu.memory_space<vmem>>, vector<8x16x16xf32>
    tpu.vector_store %arg5[%c0_23, %c0_24, %c0_25], %19 {strides = array<i32>} : memref<8x16x16xf32, #tpu.memory_space<vmem>>, vector<8x16x16xf32>,
    return
  }
  func.func @transform_0(%arg0: i32) -> (i32, i32, i32) {
    %c0_i32 = arith.constant 0 : i32
    %c0_i32_0 = arith.constant 0 : i32
    %c0_i32_1 = arith.constant 0 : i32
    return %arg0, %c0_i32, %c0_i32_0 : i32, i32, i32
  }
  func.func @transform_1(%arg0: i32) -> (i32, i32, i32) {
    %c0_i32 = arith.constant 0 : i32
    %c0_i32_0 = arith.constant 0 : i32
    %c0_i32_1 = arith.constant 0 : i32
    return %arg0, %c0_i32, %c0_i32_0 : i32, i32, i32
  }
  func.func @transform_2(%arg0: i32) -> (i32, i32, i32) {
    %c0_i32 = arith.constant 0 : i32
    %c0_i32_0 = arith.constant 0 : i32
    %c0_i32_1 = arith.constant 0 : i32
    %c0_i32_2 = arith.constant 0 : i32
    return %c0_i32, %c0_i32_0, %c0_i32_1 : i32, i32, i32
  }
  func.func @transform_3(%arg0: i32) -> (i32, i32, i32) {
    %c0_i32 = arith.constant 0 : i32
    %c0_i32_0 = arith.constant 0 : i32
    %c0_i32_1 = arith.constant 0 : i32
    %c0_i32_2 = arith.constant 0 : i32
    return %c0_i32, %c0_i32_0, %c0_i32_1 : i32, i32, i32
  }
  func.func @transform_4(%arg0: i32) -> (i32, i32, i32) {
    %c0_i32 = arith.constant 0 : i32
    %c0_i32_0 = arith.constant 0 : i32
    %c0_i32_1 = arith.constant 0 : i32
    %c0_i32_2 = arith.constant 0 : i32
    return %c0_i32, %c0_i32_0, %c0_i32_1 : i32, i32, i32
  }
}

</mosaic_0001>

<llo_original>
// kernel: tpu_custom_call.1
$region0: #{tpu_custom_call.1}
  #allocation0 [shape = 'u32[]', space=smem, size = 0x4, offset = 0x4, fixed_abs, tag = 'smem constant byte address 0x4 - core index']
  #allocation1 [shape = 'u32[144,128]{1,0:T(1,128)}', space=vmem, size = 0x12000, scoped, tag = 'internal scratch']
  %s0 = inlined_call_operand.hbm [shape: f32[8,16,16], index: 0, kind: input, shape index: {}]
  %s1 = inlined_call_operand.hbm [shape: f32[8,16,16], index: 1, kind: input, shape index: {}]
  %s2 = inlined_call_operand.hbm [shape: f32[8,16,16], index: 2, kind: output, shape index: {0}]
  %s3 = inlined_call_operand.hbm [shape: f32[8,16,16], index: 3, kind: output, shape index: {1}]
  %s4 = inlined_call_operand.hbm [shape: f32[8,16,16], index: 4, kind: output, shape index: {2}]
  %5 = xla_tuple %s2, %s3, %s4
  %s6 = sld [smem:[#allocation0]]
  $region46: #{tpu_custom_call.1} parent=0
    _
  %s8 = ssub.s32 1, %s6
  %s9 = scalar_select 0, %s8, %s6
  $region1: #{tpu_custom_call.1} parent=0
    #allocation2 [shape = 'u8[65536]{0}', space=vmem, size = 0x10000, scoped, tag = 'input window, operand 0, single buffered']
    #allocation3 [shape = 's32[1]{0}', space=sflag, size = 0x4, scoped, tag = 'scoped memory for tpu_custom_call.1']
    #allocation4 [shape = 's32[1]{0}', space=sflag, size = 0x4, scoped, tag = 'scoped memory for tpu_custom_call.1']
    #allocation5 [shape = 'u8[65536]{0}', space=vmem, size = 0x10000, scoped, tag = 'input window, operand 1, single buffered']
    #allocation6 [shape = 's32[1]{0}', space=sflag, size = 0x4, scoped, tag = 'scoped memory for tpu_custom_call.1']
    #allocation7 [shape = 'u8[65536]{0}', space=vmem, size = 0x10000, scoped, tag = 'output window, operand 0, single buffered']
    #allocation8 [shape = 'u8[65536]{0}', space=vmem, size = 0x10000, scoped, tag = 'output window, operand 1, single buffered']
    #allocation9 [shape = 's32[1]{0}', space=sflag, size = 0x4, scoped, tag = 'scoped memory for tpu_custom_call.1']
    #allocation10 [shape = 'u8[65536]{0}', space=vmem, size = 0x10000, scoped, tag = 'output window, operand 2, single buffered']
    %10 = vsyncpa [#allocation3], 0
    %11 = vsyncpa [#allocation6], 0
    %12 = vsyncpa [#allocation4], 0
    %13 = vsyncpa [#allocation9], 0
    // Predicated region
    $region2: #{tpu_custom_call.1} parent=1 // pred_check
      _
    $region3: #{tpu_custom_call.1} parent=1 // pred_check_branch
      %15 = sbr.rel (0) target = $region5
    $region4: #{tpu_custom_call.1} parent=1 // pred_region
      %s17 = ssub.s32 2048, 2048
      %18 = vsyncadd [#allocation3], %s17
      %s19 = sshll.u32 [#allocation2], 4
      %s20 = int_to_ptr.vmem [resolvable:$true] %s19
      %25 = dma.hbm_to_vmem [thread:$0]  %s0, 2048, %s20, [#allocation3], 128, 128, 8
    $region5: #{tpu_custom_call.1} parent=1 // pred_fallthru
      _
    // Predicated region
    $region6: #{tpu_custom_call.1} parent=1 // pred_check
      _
    $region7: #{tpu_custom_call.1} parent=1 // pred_check_branch
      %27 = sbr.rel (0) target = $region9
    $region8: #{tpu_custom_call.1} parent=1 // pred_region
      %s29 = ssub.s32 2048, 2048
      %30 = vsyncadd [#allocation6], %s29
      %s31 = sshll.u32 [#allocation5], 4
      %s32 = int_to_ptr.vmem [resolvable:$true] %s31
      %37 = dma.hbm_to_vmem [thread:$0]  %s1, 2048, %s32, [#allocation6], 128, 128, 8
    $region9: #{tpu_custom_call.1} parent=1 // pred_fallthru
      _
    // Predicated region
    $region10: #{tpu_custom_call.1} parent=1 // pred_check
      _
    $region11: #{tpu_custom_call.1} parent=1 // pred_check_branch
      %39 = sbr.rel (0) target = $region13
    $region12: #{tpu_custom_call.1} parent=1 // pred_region
      %40 = dma.done [#allocation3], 2048
    $region13: #{tpu_custom_call.1} parent=1 // pred_fallthru
      _
    // Predicated region
    $region14: #{tpu_custom_call.1} parent=1 // pred_check
      _
    $region15: #{tpu_custom_call.1} parent=1 // pred_check_branch
      %42 = sbr.rel (0) target = $region17
    $region16: #{tpu_custom_call.1} parent=1 // pred_region
      %43 = dma.done [#allocation6], 2048
    $region17: #{tpu_custom_call.1} parent=1 // pred_fallthru
      _
    %p44 = scmp.eq.s32.totalorder 0, 0
    // Predicated region
    $region18: #{tpu_custom_call.1} parent=1 // pred_check
      %p45 = pneg %p44
    $region19: #{tpu_custom_call.1} parent=1 // pred_check_branch
      %47 = sbr.rel (%p45) target = $region21
    $region20: #{tpu_custom_call.1} parent=1 // pred_region
      %vm48 = vcmask 130048
      %49 = vst.msk [vmem:[#allocation7] sm:$0xff] %vm48, 0.0
      %50 = vst.msk [vmem:[#allocation7 + $0x8] sm:$0xff] %vm48, 0.0
      %51 = vst.msk [vmem:[#allocation7 + $0x10] sm:$0xff] %vm48, 0.0
      %52 = vst.msk [vmem:[#allocation7 + $0x18] sm:$0xff] %vm48, 0.0
      %53 = vst.msk [vmem:[#allocation7 + $0x20] sm:$0xff] %vm48, 0.0
      %54 = vst.msk [vmem:[#allocation7 + $0x28] sm:$0xff] %vm48, 0.0
      %55 = vst.msk [vmem:[#allocation7 + $0x30] sm:$0xff] %vm48, 0.0
      %56 = vst.msk [vmem:[#allocation7 + $0x38] sm:$0xff] %vm48, 0.0
      %57 = vst.msk [vmem:[#allocation7 + $0x40] sm:$0xff] %vm48, 0.0
      %58 = vst.msk [vmem:[#allocation7 + $0x48] sm:$0xff] %vm48, 0.0
      %59 = vst.msk [vmem:[#allocation7 + $0x50] sm:$0xff] %vm48, 0.0
      %60 = vst.msk [vmem:[#allocation7 + $0x58] sm:$0xff] %vm48, 0.0
      %61 = vst.msk [vmem:[#allocation7 + $0x60] sm:$0xff] %vm48, 0.0
      %62 = vst.msk [vmem:[#allocation7 + $0x68] sm:$0xff] %vm48, 0.0
      %63 = vst.msk [vmem:[#allocation7 + $0x70] sm:$0xff] %vm48, 0.0
      %64 = vst.msk [vmem:[#allocation7 + $0x78] sm:$0xff] %vm48, 0.0
      %65 = vst.msk [vmem:[#allocation8] sm:$0xff] %vm48, 0.0
      %66 = vst.msk [vmem:[#allocation8 + $0x8] sm:$0xff] %vm48, 0.0
      %67 = vst.msk [vmem:[#allocation8 + $0x10] sm:$0xff] %vm48, 0.0
      %68 = vst.msk [vmem:[#allocation8 + $0x18] sm:$0xff] %vm48, 0.0
      %69 = vst.msk [vmem:[#allocation8 + $0x20] sm:$0xff] %vm48, 0.0
      %70 = vst.msk [vmem:[#allocation8 + $0x28] sm:$0xff] %vm48, 0.0
      %71 = vst.msk [vmem:[#allocation8 + $0x30] sm:$0xff] %vm48, 0.0
      %72 = vst.msk [vmem:[#allocation8 + $0x38] sm:$0xff] %vm48, 0.0
      %73 = vst.msk [vmem:[#allocation8 + $0x40] sm:$0xff] %vm48, 0.0
      %74 = vst.msk [vmem:[#allocation8 + $0x48] sm:$0xff] %vm48, 0.0
      %75 = vst.msk [vmem:[#allocation8 + $0x50] sm:$0xff] %vm48, 0.0
      %76 = vst.msk [vmem:[#allocation8 + $0x58] sm:$0xff] %vm48, 0.0
      %77 = vst.msk [vmem:[#allocation8 + $0x60] sm:$0xff] %vm48, 0.0
      %78 = vst.msk [vmem:[#allocation8 + $0x68] sm:$0xff] %vm48, 0.0
      %79 = vst.msk [vmem:[#allocation8 + $0x70] sm:$0xff] %vm48, 0.0
      %80 = vst.msk [vmem:[#allocation8 + $0x78] sm:$0xff] %vm48, 0.0
      %81 = vst.msk [vmem:[#allocation10] sm:$0xff] %vm48, 0.0
      %82 = vst.msk [vmem:[#allocation10 + $0x8] sm:$0xff] %vm48, 0.0
      %83 = vst.msk [vmem:[#allocation10 + $0x10] sm:$0xff] %vm48, 0.0
      %84 = vst.msk [vmem:[#allocation10 + $0x18] sm:$0xff] %vm48, 0.0
      %85 = vst.msk [vmem:[#allocation10 + $0x20] sm:$0xff] %vm48, 0.0
      %86 = vst.msk [vmem:[#allocation10 + $0x28] sm:$0xff] %vm48, 0.0
      %87 = vst.msk [vmem:[#allocation10 + $0x30] sm:$0xff] %vm48, 0.0
      %88 = vst.msk [vmem:[#allocation10 + $0x38] sm:$0xff] %vm48, 0.0
      %89 = vst.msk [vmem:[#allocation10 + $0x40] sm:$0xff] %vm48, 0.0
      %90 = vst.msk [vmem:[#allocation10 + $0x48] sm:$0xff] %vm48, 0.0
      %91 = vst.msk [vmem:[#allocation10 + $0x50] sm:$0xff] %vm48, 0.0
      %92 = vst.msk [vmem:[#allocation10 + $0x58] sm:$0xff] %vm48, 0.0
      %93 = vst.msk [vmem:[#allocation10 + $0x60] sm:$0xff] %vm48, 0.0
      %94 = vst.msk [vmem:[#allocation10 + $0x68] sm:$0xff] %vm48, 0.0
      %95 = vst.msk [vmem:[#allocation10 + $0x70] sm:$0xff] %vm48, 0.0
      %96 = vst.msk [vmem:[#allocation10 + $0x78] sm:$0xff] %vm48, 0.0
    $region21: #{tpu_custom_call.1} parent=1 // pred_fallthru
      _
    %v97 = vld [vmem:[#allocation2] sm:$0xff]
    %v98 = vld [vmem:[#allocation2 + $0x8] sm:$0xff]
    %v99 = vld [vmem:[#allocation2 + $0x10] sm:$0xff]
    %v100 = vld [vmem:[#allocation2 + $0x18] sm:$0xff]
    %v101 = vld [vmem:[#allocation2 + $0x20] sm:$0xff]
    %v102 = vld [vmem:[#allocation2 + $0x28] sm:$0xff]
    %v103 = vld [vmem:[#allocation2 + $0x30] sm:$0xff]
    %v104 = vld [vmem:[#allocation2 + $0x38] sm:$0xff]
    %v105 = vld [vmem:[#allocation2 + $0x40] sm:$0xff]
    %v106 = vld [vmem:[#allocation2 + $0x48] sm:$0xff]
    %v107 = vld [vmem:[#allocation2 + $0x50] sm:$0xff]
    %v108 = vld [vmem:[#allocation2 + $0x58] sm:$0xff]
    %v109 = vld [vmem:[#allocation2 + $0x60] sm:$0xff]
    %v110 = vld [vmem:[#allocation2 + $0x68] sm:$0xff]
    %v111 = vld [vmem:[#allocation2 + $0x70] sm:$0xff]
    %v112 = vld [vmem:[#allocation2 + $0x78] sm:$0xff]
    %v113 = vld [vmem:[#allocation5] sm:$0xff]
    %v114 = vld [vmem:[#allocation5 + $0x8] sm:$0xff]
    %v115 = vld [vmem:[#allocation5 + $0x10] sm:$0xff]
    %v116 = vld [vmem:[#allocation5 + $0x18] sm:$0xff]
    %v117 = vld [vmem:[#allocation5 + $0x20] sm:$0xff]
    %v118 = vld [vmem:[#allocation5 + $0x28] sm:$0xff]
    %v119 = vld [vmem:[#allocation5 + $0x30] sm:$0xff]
    %v120 = vld [vmem:[#allocation5 + $0x38] sm:$0xff]
    %v121 = vld [vmem:[#allocation5 + $0x40] sm:$0xff]
    %v122 = vld [vmem:[#allocation5 + $0x48] sm:$0xff]
    %v123 = vld [vmem:[#allocation5 + $0x50] sm:$0xff]
    %v124 = vld [vmem:[#allocation5 + $0x58] sm:$0xff]
    %v125 = vld [vmem:[#allocation5 + $0x60] sm:$0xff]
    %v126 = vld [vmem:[#allocation5 + $0x68] sm:$0xff]
    %v127 = vld [vmem:[#allocation5 + $0x70] sm:$0xff]
    %v128 = vld [vmem:[#allocation5 + $0x78] sm:$0xff]
    %v129 = vld [vmem:[#allocation7] sm:$0xff]
    %v130 = vld [vmem:[#allocation7 + $0x8] sm:$0xff]
    %v131 = vld [vmem:[#allocation7 + $0x10] sm:$0xff]
    %v132 = vld [vmem:[#allocation7 + $0x18] sm:$0xff]
    %v133 = vld [vmem:[#allocation7 + $0x20] sm:$0xff]
    %v134 = vld [vmem:[#allocation7 + $0x28] sm:$0xff]
    %v135 = vld [vmem:[#allocation7 + $0x30] sm:$0xff]
    %v136 = vld [vmem:[#allocation7 + $0x38] sm:$0xff]
    %v137 = vld [vmem:[#allocation7 + $0x40] sm:$0xff]
    %v138 = vld [vmem:[#allocation7 + $0x48] sm:$0xff]
    %v139 = vld [vmem:[#allocation7 + $0x50] sm:$0xff]
    %v140 = vld [vmem:[#allocation7 + $0x58] sm:$0xff]
    %v141 = vld [vmem:[#allocation7 + $0x60] sm:$0xff]
    %v142 = vld [vmem:[#allocation7 + $0x68] sm:$0xff]
    %v143 = vld [vmem:[#allocation7 + $0x70] sm:$0xff]
    %v144 = vld [vmem:[#allocation7 + $0x78] sm:$0xff]
    %v145 = vmul.f32 %v97, %v113
    %v146 = vmul.f32 %v98, %v114
    %v147 = vmul.f32 %v99, %v115
    %v148 = vmul.f32 %v100, %v116
    %v149 = vmul.f32 %v101, %v117
    %v150 = vmul.f32 %v102, %v118
    %v151 = vmul.f32 %v103, %v119
    %v152 = vmul.f32 %v104, %v120
    %v153 = vmul.f32 %v105, %v121
    %v154 = vmul.f32 %v106, %v122
    %v155 = vmul.f32 %v107, %v123
    %v156 = vmul.f32 %v108, %v124
    %v157 = vmul.f32 %v109, %v125
    %v158 = vmul.f32 %v110, %v126
    %v159 = vmul.f32 %v111, %v127
    %v160 = vmul.f32 %v112, %v128
    %v161 = vadd.f32 %v145, 0.0
    %v162 = vadd.f32 %v146, 0.0
    %v163 = vadd.f32 %v147, 0.0
    %v164 = vadd.f32 %v148, 0.0
    %v165 = vadd.f32 %v149, 0.0
    %v166 = vadd.f32 %v150, 0.0
    %v167 = vadd.f32 %v151, 0.0
    %v168 = vadd.f32 %v152, 0.0
    %v169 = vadd.f32 %v153, 0.0
    %v170 = vadd.f32 %v154, 0.0
    %v171 = vadd.f32 %v155, 0.0
    %v172 = vadd.f32 %v156, 0.0
    %v173 = vadd.f32 %v157, 0.0
    %v174 = vadd.f32 %v158, 0.0
    %v175 = vadd.f32 %v159, 0.0
    %v176 = vadd.f32 %v160, 0.0
    %v177 = vadd.f32 %v129, %v161
    %v178 = vadd.f32 %v130, %v162
    %v179 = vadd.f32 %v131, %v163
    %v180 = vadd.f32 %v132, %v164
    %v181 = vadd.f32 %v133, %v165
    %v182 = vadd.f32 %v134, %v166
    %v183 = vadd.f32 %v135, %v167
    %v184 = vadd.f32 %v136, %v168
    %v185 = vadd.f32 %v137, %v169
    %v186 = vadd.f32 %v138, %v170
    %v187 = vadd.f32 %v139, %v171
    %v188 = vadd.f32 %v140, %v172
    %v189 = vadd.f32 %v141, %v173
    %v190 = vadd.f32 %v142, %v174
    %v191 = vadd.f32 %v143, %v175
    %v192 = vadd.f32 %v144, %v176
    %vm193 = vcmask 130048
    %194 = vst.msk [vmem:[#allocation7] sm:$0xff] %vm193, %v177
    %195 = vst.msk [vmem:[#allocation7 + $0x8] sm:$0xff] %vm193, %v178
    %196 = vst.msk [vmem:[#allocation7 + $0x10] sm:$0xff] %vm193, %v179
    %197 = vst.msk [vmem:[#allocation7 + $0x18] sm:$0xff] %vm193, %v180
    %198 = vst.msk [vmem:[#allocation7 + $0x20] sm:$0xff] %vm193, %v181
    %199 = vst.msk [vmem:[#allocation7 + $0x28] sm:$0xff] %vm193, %v182
    %200 = vst.msk [vmem:[#allocation7 + $0x30] sm:$0xff] %vm193, %v183
    %201 = vst.msk [vmem:[#allocation7 + $0x38] sm:$0xff] %vm193, %v184
    %202 = vst.msk [vmem:[#allocation7 + $0x40] sm:$0xff] %vm193, %v185
    %203 = vst.msk [vmem:[#allocation7 + $0x48] sm:$0xff] %vm193, %v186
    %204 = vst.msk [vmem:[#allocation7 + $0x50] sm:$0xff] %vm193, %v187
    %205 = vst.msk [vmem:[#allocation7 + $0x58] sm:$0xff] %vm193, %v188
    %206 = vst.msk [vmem:[#allocation7 + $0x60] sm:$0xff] %vm193, %v189
    %207 = vst.msk [vmem:[#allocation7 + $0x68] sm:$0xff] %vm193, %v190
    %208 = vst.msk [vmem:[#allocation7 + $0x70] sm:$0xff] %vm193, %v191
    %209 = vst.msk [vmem:[#allocation7 + $0x78] sm:$0xff] %vm193, %v192
    %v210 = vld [vmem:[#allocation8] sm:$0xff]
    %v211 = vld [vmem:[#allocation8 + $0x8] sm:$0xff]
    %v212 = vld [vmem:[#allocation8 + $0x10] sm:$0xff]
    %v213 = vld [vmem:[#allocation8 + $0x18] sm:$0xff]
    %v214 = vld [vmem:[#allocation8 + $0x20] sm:$0xff]
    %v215 = vld [vmem:[#allocation8 + $0x28] sm:$0xff]
    %v216 = vld [vmem:[#allocation8 + $0x30] sm:$0xff]
    %v217 = vld [vmem:[#allocation8 + $0x38] sm:$0xff]
    %v218 = vld [vmem:[#allocation8 + $0x40] sm:$0xff]
    %v219 = vld [vmem:[#allocation8 + $0x48] sm:$0xff]
    %v220 = vld [vmem:[#allocation8 + $0x50] sm:$0xff]
    %v221 = vld [vmem:[#allocation8 + $0x58] sm:$0xff]
    %v222 = vld [vmem:[#allocation8 + $0x60] sm:$0xff]
    %v223 = vld [vmem:[#allocation8 + $0x68] sm:$0xff]
    %v224 = vld [vmem:[#allocation8 + $0x70] sm:$0xff]
    %v225 = vld [vmem:[#allocation8 + $0x78] sm:$0xff]
    %v226 = vadd.f32 %v97, 0.0
    %v227 = vadd.f32 %v98, 0.0
    %v228 = vadd.f32 %v99, 0.0
    %v229 = vadd.f32 %v100, 0.0
    %v230 = vadd.f32 %v101, 0.0
    %v231 = vadd.f32 %v102, 0.0
    %v232 = vadd.f32 %v103, 0.0
    %v233 = vadd.f32 %v104, 0.0
    %v234 = vadd.f32 %v105, 0.0
    %v235 = vadd.f32 %v106, 0.0
    %v236 = vadd.f32 %v107, 0.0
    %v237 = vadd.f32 %v108, 0.0
    %v238 = vadd.f32 %v109, 0.0
    %v239 = vadd.f32 %v110, 0.0
    %v240 = vadd.f32 %v111, 0.0
    %v241 = vadd.f32 %v112, 0.0
    %v242 = vadd.f32 %v210, %v226
    %v243 = vadd.f32 %v211, %v227
    %v244 = vadd.f32 %v212, %v228
    %v245 = vadd.f32 %v213, %v229
    %v246 = vadd.f32 %v214, %v230
    %v247 = vadd.f32 %v215, %v231
    %v248 = vadd.f32 %v216, %v232
    %v249 = vadd.f32 %v217, %v233
    %v250 = vadd.f32 %v218, %v234
    %v251 = vadd.f32 %v219, %v235
    %v252 = vadd.f32 %v220, %v236
    %v253 = vadd.f32 %v221, %v237
    %v254 = vadd.f32 %v222, %v238
    %v255 = vadd.f32 %v223, %v239
    %v256 = vadd.f32 %v224, %v240
    %v257 = vadd.f32 %v225, %v241
    %258 = vst.msk [vmem:[#allocation8] sm:$0xff] %vm193, %v242
    %259 = vst.msk [vmem:[#allocation8 + $0x8] sm:$0xff] %vm193, %v243
    %260 = vst.msk [vmem:[#allocation8 + $0x10] sm:$0xff] %vm193, %v244
    %261 = vst.msk [vmem:[#allocation8 + $0x18] sm:$0xff] %vm193, %v245
    %262 = vst.msk [vmem:[#allocation8 + $0x20] sm:$0xff] %vm193, %v246
    %263 = vst.msk [vmem:[#allocation8 + $0x28] sm:$0xff] %vm193, %v247
    %264 = vst.msk [vmem:[#allocation8 + $0x30] sm:$0xff] %vm193, %v248
    %265 = vst.msk [vmem:[#allocation8 + $0x38] sm:$0xff] %vm193, %v249
    %266 = vst.msk [vmem:[#allocation8 + $0x40] sm:$0xff] %vm193, %v250
    %267 = vst.msk [vmem:[#allocation8 + $0x48] sm:$0xff] %vm193, %v251
    %268 = vst.msk [vmem:[#allocation8 + $0x50] sm:$0xff] %vm193, %v252
    %269 = vst.msk [vmem:[#allocation8 + $0x58] sm:$0xff] %vm193, %v253
    %270 = vst.msk [vmem:[#allocation8 + $0x60] sm:$0xff] %vm193, %v254
    %271 = vst.msk [vmem:[#allocation8 + $0x68] sm:$0xff] %vm193, %v255
    %272 = vst.msk [vmem:[#allocation8 + $0x70] sm:$0xff] %vm193, %v256
    %273 = vst.msk [vmem:[#allocation8 + $0x78] sm:$0xff] %vm193, %v257
    %v274 = vld [vmem:[#allocation10] sm:$0xff]
    %v275 = vld [vmem:[#allocation10 + $0x8] sm:$0xff]
    %v276 = vld [vmem:[#allocation10 + $0x10] sm:$0xff]
    %v277 = vld [vmem:[#allocation10 + $0x18] sm:$0xff]
    %v278 = vld [vmem:[#allocation10 + $0x20] sm:$0xff]
    %v279 = vld [vmem:[#allocation10 + $0x28] sm:$0xff]
    %v280 = vld [vmem:[#allocation10 + $0x30] sm:$0xff]
    %v281 = vld [vmem:[#allocation10 + $0x38] sm:$0xff]
    %v282 = vld [vmem:[#allocation10 + $0x40] sm:$0xff]
    %v283 = vld [vmem:[#allocation10 + $0x48] sm:$0xff]
    %v284 = vld [vmem:[#allocation10 + $0x50] sm:$0xff]
    %v285 = vld [vmem:[#allocation10 + $0x58] sm:$0xff]
    %v286 = vld [vmem:[#allocation10 + $0x60] sm:$0xff]
    %v287 = vld [vmem:[#allocation10 + $0x68] sm:$0xff]
    %v288 = vld [vmem:[#allocation10 + $0x70] sm:$0xff]
    %v289 = vld [vmem:[#allocation10 + $0x78] sm:$0xff]
    %v290 = vadd.f32 %v113, 0.0
    %v291 = vadd.f32 %v114, 0.0
    %v292 = vadd.f32 %v115, 0.0
    %v293 = vadd.f32 %v116, 0.0
    %v294 = vadd.f32 %v117, 0.0
    %v295 = vadd.f32 %v118, 0.0
    %v296 = vadd.f32 %v119, 0.0
    %v297 = vadd.f32 %v120, 0.0
    %v298 = vadd.f32 %v121, 0.0
    %v299 = vadd.f32 %v122, 0.0
    %v300 = vadd.f32 %v123, 0.0
    %v301 = vadd.f32 %v124, 0.0
    %v302 = vadd.f32 %v125, 0.0
    %v303 = vadd.f32 %v126, 0.0
    %v304 = vadd.f32 %v127, 0.0
    %v305 = vadd.f32 %v128, 0.0
    %v306 = vadd.f32 %v274, %v290
    %v307 = vadd.f32 %v275, %v291
    %v308 = vadd.f32 %v276, %v292
    %v309 = vadd.f32 %v277, %v293
    %v310 = vadd.f32 %v278, %v294
    %v311 = vadd.f32 %v279, %v295
    %v312 = vadd.f32 %v280, %v296
    %v313 = vadd.f32 %v281, %v297
    %v314 = vadd.f32 %v282, %v298
    %v315 = vadd.f32 %v283, %v299
    %v316 = vadd.f32 %v284, %v300
    %v317 = vadd.f32 %v285, %v301
    %v318 = vadd.f32 %v286, %v302
    %v319 = vadd.f32 %v287, %v303
    %v320 = vadd.f32 %v288, %v304
    %v321 = vadd.f32 %v289, %v305
    %322 = vst.msk [vmem:[#allocation10] sm:$0xff] %vm193, %v306
    %323 = vst.msk [vmem:[#allocation10 + $0x8] sm:$0xff] %vm193, %v307
    %324 = vst.msk [vmem:[#allocation10 + $0x10] sm:$0xff] %vm193, %v308
    %325 = vst.msk [vmem:[#allocation10 + $0x18] sm:$0xff] %vm193, %v309
    %326 = vst.msk [vmem:[#allocation10 + $0x20] sm:$0xff] %vm193, %v310
    %327 = vst.msk [vmem:[#allocation10 + $0x28] sm:$0xff] %vm193, %v311
    %328 = vst.msk [vmem:[#allocation10 + $0x30] sm:$0xff] %vm193, %v312
    %329 = vst.msk [vmem:[#allocation10 + $0x38] sm:$0xff] %vm193, %v313
    %330 = vst.msk [vmem:[#allocation10 + $0x40] sm:$0xff] %vm193, %v314
    %331 = vst.msk [vmem:[#allocation10 + $0x48] sm:$0xff] %vm193, %v315
    %332 = vst.msk [vmem:[#allocation10 + $0x50] sm:$0xff] %vm193, %v316
    %333 = vst.msk [vmem:[#allocation10 + $0x58] sm:$0xff] %vm193, %v317
    %334 = vst.msk [vmem:[#allocation10 + $0x60] sm:$0xff] %vm193, %v318
    %335 = vst.msk [vmem:[#allocation10 + $0x68] sm:$0xff] %vm193, %v319
    %336 = vst.msk [vmem:[#allocation10 + $0x70] sm:$0xff] %vm193, %v320
    %337 = vst.msk [vmem:[#allocation10 + $0x78] sm:$0xff] %vm193, %v321
    // Predicated region
    $region22: #{tpu_custom_call.1} parent=1 // pred_check
      _
    $region23: #{tpu_custom_call.1} parent=1 // pred_check_branch
      %339 = sbr.rel (0) target = $region25
    $region24: #{tpu_custom_call.1} parent=1 // pred_region
      %s341 = ssub.s32 2048, 2048
      %342 = vsyncadd [#allocation4], %s341
      %s343 = sshll.u32 [#allocation7], 4
      %s344 = int_to_ptr.vmem [resolvable:$true] %s343
      %349 = dma.vmem_to_hbm [thread:$0]  %s344, 2048, %s2, [#allocation4], 128, 128, 8
    $region25: #{tpu_custom_call.1} parent=1 // pred_fallthru
      _
    // Predicated region
    $region26: #{tpu_custom_call.1} parent=1 // pred_check
      _
    $region27: #{tpu_custom_call.1} parent=1 // pred_check_branch
      %351 = sbr.rel (0) target = $region29
    $region28: #{tpu_custom_call.1} parent=1 // pred_region
      %s353 = ssub.s32 2048, 2048
      %354 = vsyncadd [#allocation9], %s353
      %s355 = sshll.u32 [#allocation8], 4
      %s356 = int_to_ptr.vmem [resolvable:$true] %s355
      %361 = dma.vmem_to_hbm [thread:$0]  %s356, 2048, %s3, [#allocation9], 128, 128, 8
    $region29: #{tpu_custom_call.1} parent=1 // pred_fallthru
      _
    // Predicated region
    $region30: #{tpu_custom_call.1} parent=1 // pred_check
      _
    $region31: #{tpu_custom_call.1} parent=1 // pred_check_branch
      %363 = sbr.rel (0) target = $region33
    $region32: #{tpu_custom_call.1} parent=1 // pred_region
      %s365 = ssub.s32 2048, 2048
      %366 = vsyncadd [#allocation9], %s365
      %s367 = sshll.u32 [#allocation10], 4
      %s368 = int_to_ptr.vmem [resolvable:$true] %s367
      %373 = dma.vmem_to_hbm [thread:$0]  %s368, 2048, %s4, [#allocation9], 128, 128, 8
    $region33: #{tpu_custom_call.1} parent=1 // pred_fallthru
      _
    // Predicated region
    $region34: #{tpu_custom_call.1} parent=1 // pred_check
      _
    $region35: #{tpu_custom_call.1} parent=1 // pred_check_branch
      %375 = sbr.rel (0) target = $region37
    $region36: #{tpu_custom_call.1} parent=1 // pred_region
      %376 = dma.done [#allocation4], 2048
    $region37: #{tpu_custom_call.1} parent=1 // pred_fallthru
      _
    // Predicated region
    $region38: #{tpu_custom_call.1} parent=1 // pred_check
      _
    $region39: #{tpu_custom_call.1} parent=1 // pred_check_branch
      %378 = sbr.rel (0) target = $region41
    $region40: #{tpu_custom_call.1} parent=1 // pred_region
      %379 = dma.done [#allocation9], 2048
    $region41: #{tpu_custom_call.1} parent=1 // pred_fallthru
      _
    // Predicated region
    $region42: #{tpu_custom_call.1} parent=1 // pred_check
      _
    $region43: #{tpu_custom_call.1} parent=1 // pred_check_branch
      %381 = sbr.rel (0) target = $region45
    $region44: #{tpu_custom_call.1} parent=1 // pred_region
      %382 = dma.done [#allocation9], 2048
    $region45: #{tpu_custom_call.1} parent=1 // pred_fallthru
      _
    %383 = vsyncpa [#allocation3], 1
    %384 = vsyncpa [#allocation6], 1
    %385 = vsyncpa [#allocation4], 1
    %386 = vsyncpa [#allocation9], 1

</llo_original>
